<compile_context>
chip_gen: v6e
topology: v6e:2x2x1
jax: 0.10.0
libtpu: 0.0.40
codegen_flags: <defaults>
</compile_context>

<pallas_src>
import functools

import jax
import jax.numpy as jnp
from jax.experimental import pallas as pl
from jax.experimental.pallas import tpu as pltpu

_LANE = 128  # vreg lane width (last-dim alignment for a lane-dense output store)


def _round_up(x, m):
    return (x + m - 1) // m * m


def _pick_batch_tile(B):
    """Batch tile size (rows per grid step)."""
    if B <= 128:
        return B        # single full-dim block (exempt from the 8-row rule)
    if B < 512:
        return 128      # >=2 grid steps -> both v7x TensorCores get work
    return 256          # 256-row tiles fill the v6e/v7x 256x256 MXU


def mynet_kernel(x_ref, w_ref, b_ref, o_ref):
    # x_ref: (tb, K) f32    w_ref: (K, Np) bf16    b_ref: (1, Np) f32
    x = x_ref[...].astype(w_ref.dtype)                # VPU cast, MXU eats bf16
    acc = jnp.dot(x, w_ref[...], preferred_element_type=jnp.float32)
    o_ref[...] = (acc + b_ref[...]).astype(o_ref.dtype)   # f32 epilogue, lane-dense vst


def prepare_params(w2, b2, *, compute_dtype=jnp.bfloat16):
    """One-time (init-time) prep of output_layer params.

    PyTorch layout w2: (out_features, in_features), b2: (out_features,).
    Returns W transposed to (in_features, Np) with only the N (lane) dim
    zero-padded to a multiple of 128, plus bias padded to (1, Np) kept in f32.
    K is intentionally NOT padded — Mosaic handles small K internally.
    """
    w2 = jnp.asarray(w2, jnp.float32)
    b2 = jnp.asarray(b2, jnp.float32)
    out_f, in_f = w2.shape
    n_pad = _round_up(out_f, _LANE)
    w_t = jnp.zeros((in_f, n_pad), jnp.float32).at[:, :out_f].set(w2.T)
    b = jnp.zeros((1, n_pad), jnp.float32).at[:, :out_f].set(b2)
    return w_t.astype(compute_dtype), b


@functools.partial(jax.jit, static_argnames=("out_features",))
def mynet_forward(x, w_pad, b_pad, *, out_features):
    """x: (B, in_features) f32. Returns (B, out_features) f32 == output_layer(x)."""
    B, in_f = x.shape
    k, n_pad = w_pad.shape
    assert k == in_f, "weight in_features must match x"

    tb = _pick_batch_tile(B)
    grid = (pl.cdiv(B, tb),)

    cost = pl.CostEstimate(
        flops=2 * B * in_f * n_pad,
        transcendentals=0,
        bytes_accessed=(B * in_f * x.dtype.itemsize
                        + in_f * n_pad * w_pad.dtype.itemsize
                        + n_pad * 4
                        + B * n_pad * 4),
    )

    out_padded = pl.pallas_call(
        mynet_kernel,
        out_shape=jax.ShapeDtypeStruct((B, n_pad), jnp.float32),
        grid_spec=pltpu.PrefetchScalarGridSpec(
            num_scalar_prefetch=0,
            grid=grid,
            in_specs=[
                # x: tiled over batch; last dim == full array dim (no pad needed).
                pl.BlockSpec((tb, in_f), lambda i: (i, 0)),
                # W, b: VMEM-resident across the grid (tiny). For hidden >= ~2-4K
                # on v7x, add an N grid axis or pipeline_mode=pl.Buffered(1).
                pl.BlockSpec((in_f, n_pad), lambda i: (0, 0)),
                pl.BlockSpec((1, n_pad), lambda i: (0, 0)),
            ],
            out_specs=pl.BlockSpec((tb, n_pad), lambda i: (i, 0)),
        ),
        compiler_params=pltpu.CompilerParams(
            dimension_semantics=("parallel",)),
        cost_estimate=cost,
    )(x, w_pad, b_pad)

    # TODO(synk): if the consumer can read the (B, Np) padded slab directly
    # (or tolerates bf16), drop this slice / keep bf16 to cut output writeback.
    return out_padded[:, :out_features]


def _init_linear(key, out_features, in_features):
    """Deterministic PyTorch-style nn.Linear init: U(-1/sqrt(fan_in), +1/sqrt(fan_in))."""
    kw, kb = jax.random.split(key)
    bound = 1.0 / jnp.sqrt(jnp.float32(in_features))
    w = jax.random.uniform(kw, (out_features, in_features), jnp.float32,
                           minval=-bound, maxval=bound)
    b = jax.random.uniform(kb, (out_features,), jnp.float32,
                           minval=-bound, maxval=bound)
    return w, b


if __name__ == "__main__":
    # input_size must equal hidden_size for the reference's output_layer(x) to be valid.
    batch, input_size, hidden_size, output_size = 8, 32, 32, 16

    root = jax.random.PRNGKey(0)
    kx, k1, k2 = jax.random.split(root, 3)

    x = jax.random.normal(kx, (batch, input_size), jnp.float32)
    w1, b1 = _init_linear(k1, hidden_size, input_size)   # input_layer (dead in reference forward)
    w2, b2 = _init_linear(k2, output_size, hidden_size)  # output_layer (what is returned)

    # w1/b1 intentionally never reach the kernel: their result is discarded by
    # the reference forward, so shipping them to VMEM is pure wasted bandwidth.
    compute_dtype = jnp.bfloat16  # native MXU dtype on v5e/v6e/v7x
    w_pad, b_pad = prepare_params(w2, b2, compute_dtype=compute_dtype)

    out = mynet_forward(x, w_pad, b_pad, out_features=output_size)
    out = jax.block_until_ready(out)

    # Pure-JAX reference of the (buggy) forward semantics, with the same bf16
    # rounding of x / W and f32 accumulation + f32 bias as the kernel.
    x_c = x.astype(compute_dtype).astype(jnp.float32)
    w_c = w2.T.astype(compute_dtype).astype(jnp.float32)
    ref = x_c @ w_c + b2

    assert out.shape == (batch, output_size)
    assert jnp.allclose(out, ref, atol=1e-5, rtol=1e-5)

    print("KERNEL_OK")
</pallas_src>

<mosaic_0001>
module attributes {stable_mosaic.version = 11 : i64} {
  func.func @mynet_kernel(%arg0: i32, %arg1: memref<8x32xf32, #tpu.memory_space<vmem>>, %arg2: memref<32x128xbf16, #tpu.memory_space<vmem>>, %arg3: memref<1x128xf32, #tpu.memory_space<vmem>>, %arg4: memref<8x128xf32, #tpu.memory_space<vmem>>) attributes {dimension_semantics = [#tpu.dimension_semantics<parallel>], iteration_bounds = array<i64: 1>, scalar_prefetch = 0 : i64, scratch_operands = 0 : i64, tpu.core_type = #tpu.core_type<tc>, window_params = [{transform_indices = @transform_0, window_bounds = array<i64: 8, 32>}, {pipeline_mode = #tpu.pipeline_mode<synchronous>, transform_indices = @transform_1, window_bounds = array<i64: 32, 128>}, {pipeline_mode = #tpu.pipeline_mode<synchronous>, transform_indices = @transform_2, window_bounds = array<i64: 1, 128>}, {transform_indices = @transform_3, window_bounds = array<i64: 8, 128>}]} {
    %c0 = arith.constant 0 : index
    %c0_0 = arith.constant 0 : index
    %0 = vector.load %arg1[%c0, %c0_0] : memref<8x32xf32, #tpu.memory_space<vmem>>, vector<8x32xf32>
    %1 = arith.truncf %0 : vector<8x32xf32> to vector<8x32xbf16>
    %c0_1 = arith.constant 0 : index
    %c0_2 = arith.constant 0 : index
    %2 = vector.load %arg2[%c0_1, %c0_2] : memref<32x128xbf16, #tpu.memory_space<vmem>>, vector<32x128xbf16>
    %cst = arith.constant dense<0.000000e+00> : vector<8x128xf32>
    %3 = tpu.matmul %1, %2, %cst {dimension_numbers = #tpu.dot_dimension_numbers<[1], [0], [0], [1], [0, 0, 1, 1], [], []>} : vector<8x32xbf16>, vector<32x128xbf16>, vector<8x128xf32> -> vector<8x128xf32>
    %c0_3 = arith.constant 0 : index
    %c0_4 = arith.constant 0 : index
    %4 = vector.load %arg3[%c0_3, %c0_4] : memref<1x128xf32, #tpu.memory_space<vmem>>, vector<1x128xf32>
    %5 = vector.broadcast %4 : vector<1x128xf32> to vector<8x128xf32>
    %6 = arith.addf %3, %5 : vector<8x128xf32>
    %c0_5 = arith.constant 0 : index
    %c0_6 = arith.constant 0 : index
    %7 = vector.load %arg4[%c0_5, %c0_6] : memref<8x128xf32, #tpu.memory_space<vmem>>, vector<8x128xf32>
    tpu.vector_store %arg4[%c0_5, %c0_6], %6 {strides = array<i32>} : memref<8x128xf32, #tpu.memory_space<vmem>>, vector<8x128xf32>,
    return
  }
  func.func @transform_0(%arg0: i32) -> (i32, i32) {
    %c0_i32 = arith.constant 0 : i32
    %c0_i32_0 = arith.constant 0 : i32
    return %arg0, %c0_i32 : i32, i32
  }
  func.func @transform_1(%arg0: i32) -> (i32, i32) {
    %c0_i32 = arith.constant 0 : i32
    %c0_i32_0 = arith.constant 0 : i32
    %c0_i32_1 = arith.constant 0 : i32
    return %c0_i32, %c0_i32_0 : i32, i32
  }
  func.func @transform_2(%arg0: i32) -> (i32, i32) {
    %c0_i32 = arith.constant 0 : i32
    %c0_i32_0 = arith.constant 0 : i32
    %c0_i32_1 = arith.constant 0 : i32
    return %c0_i32, %c0_i32_0 : i32, i32
  }
  func.func @transform_3(%arg0: i32) -> (i32, i32) {
    %c0_i32 = arith.constant 0 : i32
    %c0_i32_0 = arith.constant 0 : i32
    return %arg0, %c0_i32 : i32, i32
  }
}

</mosaic_0001>

<llo_original>
// kernel: mynet_forward.1
$region0: #{mynet_forward.1}
  #allocation0 [shape = 'u32[]', space=smem, size = 0x4, offset = 0x4, fixed_abs, tag = 'smem constant byte address 0x4 - core index']
  #allocation1 [shape = 'u32[144,128]{1,0:T(1,128)}', space=vmem, size = 0x12000, scoped, tag = 'internal scratch']
  %s0 = inlined_call_operand.hbm [shape: f32[8,32], index: 0, kind: input, shape index: {}]
  %s1 = inlined_call_operand.hbm [shape: bf16[32,128], index: 1, kind: input, shape index: {}]
  %s2 = inlined_call_operand.vmem [shape: f32[1,128], index: 2, kind: input, shape index: {}]
  %s3 = inlined_call_operand.hbm [shape: f32[8,128], index: 3, kind: output, shape index: {}]
  %s4 = sld [smem:[#allocation0]]
  $region30: #{mynet_forward.1} parent=0
    _
  %s6 = ssub.s32 1, %s4
  %s7 = scalar_select 0, %s6, %s4
  $region1: #{mynet_forward.1} parent=0
    #allocation2 [shape = 'u8[4096]{0}', space=vmem, size = 0x1000, scoped, tag = 'input window, operand 0, single buffered']
    #allocation3 [shape = 's32[1]{0}', space=sflag, size = 0x4, scoped, tag = 'scoped memory for mynet_forward.1']
    #allocation4 [shape = 's32[1]{0}', space=sflag, size = 0x4, scoped, tag = 'scoped memory for mynet_forward.1']
    #allocation5 [shape = 'u8[8192]{0}', space=vmem, size = 0x2000, scoped, tag = 'input window, operand 1, single buffered']
    #allocation6 [shape = 's32[1]{0}', space=sflag, size = 0x4, scoped, tag = 'scoped memory for mynet_forward.1']
    #allocation7 [shape = 'u8[4096]{0}', space=vmem, size = 0x1000, scoped, tag = 'output window, operand 0, single buffered']
    %8 = vsyncpa [#allocation3], 0
    %9 = vsyncpa [#allocation6], 0
    %10 = vsyncpa [#allocation4], 0
    // Predicated region
    $region2: #{mynet_forward.1} parent=1 // pred_check
      _
    $region3: #{mynet_forward.1} parent=1 // pred_check_branch
      %12 = sbr.rel (0) target = $region5
    $region4: #{mynet_forward.1} parent=1 // pred_region
      %s14 = ssub.s32 128, 128
      %15 = vsyncadd [#allocation3], %s14
      %s17 = sshll.u32 [#allocation2], 4
      %s18 = int_to_ptr.vmem [resolvable:$true] %s17
      %20 = dma.hbm_to_vmem [thread:$0]  %s0, 128, %s18, [#allocation3]
    $region5: #{mynet_forward.1} parent=1 // pred_fallthru
      _
    // Predicated region
    $region6: #{mynet_forward.1} parent=1 // pred_check
      _
    $region7: #{mynet_forward.1} parent=1 // pred_check_branch
      %22 = sbr.rel (0) target = $region9
    $region8: #{mynet_forward.1} parent=1 // pred_region
      %s24 = ssub.s32 256, 256
      %25 = vsyncadd [#allocation6], %s24
      %s26 = sshll.u32 [#allocation5], 4
      %s27 = int_to_ptr.vmem [resolvable:$true] %s26
      %32 = dma.hbm_to_vmem [thread:$0]  %s1, 256, %s27, [#allocation6], 64, 64, 4
    $region9: #{mynet_forward.1} parent=1 // pred_fallthru
      _
    // Predicated region
    $region10: #{mynet_forward.1} parent=1 // pred_check
      _
    $region11: #{mynet_forward.1} parent=1 // pred_check_branch
      %34 = sbr.rel (0) target = $region13
    $region12: #{mynet_forward.1} parent=1 // pred_region
      _
    $region13: #{mynet_forward.1} parent=1 // pred_fallthru
      _
    // Predicated region
    $region14: #{mynet_forward.1} parent=1 // pred_check
      _
    $region15: #{mynet_forward.1} parent=1 // pred_check_branch
      %36 = sbr.rel (0) target = $region17
    $region16: #{mynet_forward.1} parent=1 // pred_region
      %37 = dma.done [#allocation3], 128
    $region17: #{mynet_forward.1} parent=1 // pred_fallthru
      _
    // Predicated region
    $region18: #{mynet_forward.1} parent=1 // pred_check
      _
    $region19: #{mynet_forward.1} parent=1 // pred_check_branch
      %39 = sbr.rel (0) target = $region21
    $region20: #{mynet_forward.1} parent=1 // pred_region
      %40 = dma.done [#allocation6], 256
    $region21: #{mynet_forward.1} parent=1 // pred_fallthru
      _
    %v42 = vld [vmem:[#allocation2] sm:$0xff]
    %v43 = vpack.c.bf16 %v42, %v42
    %v44 = vld [vmem:[#allocation5] sm:$0xf]
    %v45 = vld [vmem:[#allocation5 + $0x4] sm:$0xf]
    %v46 = vld [vmem:[#allocation5 + $0x8] sm:$0xf]
    %v47 = vld [vmem:[#allocation5 + $0xc] sm:$0xf]
    %v48 = vld [vmem:[%s2] sm:$0x1]
    %v50 = vlaneseq
    %v51 = vshrl.u32 %v50, 7
    %v52 = vsub.s32 0, %v51
    %v53 = vrot.slane %v48, %v52
    %v59 = vunpack.c.l.b16 %v44
    %v60 = vunpack.c.l.b16 %v45
    %v61 = vunpack.c.l.b16 %v46
    %v62 = vunpack.c.l.b16 %v47
    %v63 = vpack.c.b16 %v60, %v59
    %v64 = vpack.c.b16 %v62, %v61
    %vm67 = vcmask 261120
    %v69 = vsel %vm67, %v43, 0
    %71 = vmatprep.subr.bf16.mxu0 0
    %72 = vmatpush1.bf16.msra.mxu0 0
    %73 = vmatprep.subr.bf16.mxu0 0
    %74 = vmatpush1.bf16.msra.mxu0 0
    %75 = vmatprep.subr.bf16.mxu0 0
    %76 = vmatpush1.bf16.msra.mxu0 0
    %77 = vmatprep.subr.bf16.mxu0 0
    %78 = vmatpush1.bf16.msra.mxu0 0
    %79 = vmatprep.subr.bf16.mxu0 0
    %80 = vmatpush1.bf16.msra.mxu0 0
    %81 = vmatprep.subr.bf16.mxu0 0
    %82 = vmatpush1.bf16.msra.mxu0 0
    %83 = vmatprep.subr.bf16.mxu0 0
    %84 = vmatpush1.bf16.msra.mxu0 %v64
    %85 = vmatprep.subr.bf16.mxu0 0
    %86 = vmatpush1.bf16.msra.mxu0 %v63
    %87 = vmatprep.subr.bf16.mxu0 0
    %88 = vmatpush2.bf16.msra.mxu0 0
    %89 = vmatprep.subr.bf16.mxu0 0
    %90 = vmatpush2.bf16.msra.mxu0 0
    %91 = vmatprep.subr.bf16.mxu0 0
    %92 = vmatpush2.bf16.msra.mxu0 0
    %93 = vmatprep.subr.bf16.mxu0 0
    %94 = vmatpush2.bf16.msra.mxu0 0
    %95 = vmatprep.subr.bf16.mxu0 0
    %96 = vmatpush2.bf16.msra.mxu0 0
    %97 = vmatprep.subr.bf16.mxu0 0
    %98 = vmatpush2.bf16.msra.mxu0 0
    %99 = vmatprep.subr.bf16.mxu0 0
    %100 = vmatpush2.bf16.msra.mxu0 0
    %101 = vmatprep.subr.bf16.mxu0 0
    %102 = vmatpush2.bf16.msra.mxu0 0
    %103 = vmatprep.mubr.bf16.mxu0 0
    %104 = vmatmul.mubr.bf16.gmra.mxu0 %v69
    %v105 = vpop.f32.mrf.mxu0
    %v106 = vadd.f32 %v53, %v105
    %v107 = vpop.f32.mrf.mxu0
    %v108 = vpop.f32.mrf.mxu0
    %v109 = vpop.f32.mrf.mxu0
    %110 = vdwg.mxu0
    %111 = vst [vmem:[#allocation7] sm:$0xff] %v106
    // Predicated region
    $region22: #{mynet_forward.1} parent=1 // pred_check
      _
    $region23: #{mynet_forward.1} parent=1 // pred_check_branch
      %113 = sbr.rel (0) target = $region25
    $region24: #{mynet_forward.1} parent=1 // pred_region
      %s115 = ssub.s32 128, 128
      %116 = vsyncadd [#allocation4], %s115
      %s118 = sshll.u32 [#allocation7], 4
      %s119 = int_to_ptr.vmem [resolvable:$true] %s118
      %121 = dma.vmem_to_hbm [thread:$0]  %s119, 128, %s3, [#allocation4]
    $region25: #{mynet_forward.1} parent=1 // pred_fallthru
      _
    // Predicated region
    $region26: #{mynet_forward.1} parent=1 // pred_check
      _
    $region27: #{mynet_forward.1} parent=1 // pred_check_branch
      %123 = sbr.rel (0) target = $region29
    $region28: #{mynet_forward.1} parent=1 // pred_region
      %124 = dma.done [#allocation4], 128
    $region29: #{mynet_forward.1} parent=1 // pred_fallthru
      _
    %125 = vsyncpa [#allocation3], 1
    %126 = vsyncpa [#allocation6], 1
    %127 = vsyncpa [#allocation4], 1

</llo_original>
